<compile_context>
chip_gen: v6e
topology: v6e:2x2x1
jax: 0.10.0
libtpu: 0.0.40
codegen_flags: <defaults>
</compile_context>

<pallas_src>
import functools

import jax
import jax.numpy as jnp
from jax import lax
from jax.experimental import pallas as pl
from jax.experimental.pallas import tpu as pltpu

LANE = 128
MAX_BLOCK_ROWS = 2048  # (2048, 128) f32 = 1 MiB per stream per buffer; safe on v5e/v6e/v7x


# ---------------------------------------------------------------------------
# Glue: layout / flatten / pad helpers (plain JAX, static shapes)
# ---------------------------------------------------------------------------
def _layout(n: int):
    """Pick block rows (multiple of 8, capped) and the padded total row count."""
    rows = -(-n // LANE)                 # ceil(n / 128)
    rows = ((rows + 7) // 8) * 8         # round up to a multiple of 8 sublanes
    block_rows = min(MAX_BLOCK_ROWS, rows)
    padded_rows = -(-rows // block_rows) * block_rows
    return block_rows, padded_rows


def _flatten_pad(x, padded_rows: int, pad_value=0.0):
    """Flatten to 1-D, pad to padded_rows*LANE, reshape to (padded_rows, LANE).

    Keeps floating dtypes (e.g. bf16) to preserve HBM bandwidth; the kernels
    upcast to f32 internally.  Non-float inputs (bool masks) are cast to f32.
    """
    flat = jnp.ravel(x)
    if not jnp.issubdtype(flat.dtype, jnp.floating):
        flat = flat.astype(jnp.float32)
    n = flat.shape[0]
    n_pad = padded_rows * LANE
    if n_pad != n:
        flat = jnp.pad(flat, (0, n_pad - n), constant_values=pad_value)
    return flat.reshape(padded_rows, LANE)


# ---------------------------------------------------------------------------
# Kernels (the reduction hot path) — each grid step writes one (1, 8, 128)
# lane-dense partial-sum block; no loop-carried state, grid is "parallel".
# ---------------------------------------------------------------------------
def _block_partial(x):
    """(block_rows, 128) -> (1, 8, 128) partial sum using only vreg (VPU) adds."""
    r = x.shape[0] // 8
    return jnp.sum(x.reshape(r, 8, LANE), axis=0).reshape(1, 8, LANE)


def _gaussian_partial_kernel(pred_ref, lab_ref, var_ref, out_ref):
    pred = pred_ref[...].astype(jnp.float32)
    lab = lab_ref[...].astype(jnp.float32)
    var = jnp.maximum(var_ref[...].astype(jnp.float32), 1e-10)  # variance clamp
    diff = lab - pred
    loss = 0.5 * jnp.log(var) + diff * diff / (2.0 * var)
    out_ref[...] = _block_partial(loss)


def _smooth_gaussian_partial_kernel(pred_ref, lab_ref, var_ref, out_ref, *, dem):
    pred = pred_ref[...].astype(jnp.float32)
    lab = lab_ref[...].astype(jnp.float32)
    var = jnp.maximum(var_ref[...].astype(jnp.float32), 1e-10)
    diff = jnp.abs(lab - pred)
    logv = jnp.log(var)                 # computed once; 0.5*log(sqrt(v)) == 0.25*logv
    inv_var = 1.0 / var
    rsq = lax.rsqrt(var)
    loss1 = 0.5 * logv + diff * diff * (0.5 * inv_var)
    loss2 = 0.25 * logv + 0.5 * diff * rsq
    # torch.cat(loss_1, loss_2).mean() == mean over all elements of the
    # element-wise piecewise loss (the partition covers each element once).
    loss = jnp.where(diff < dem, loss1, loss2)
    out_ref[...] = _block_partial(loss)


def _mae_partial_kernel(pred_ref, lab_ref, out_ref):
    diff = jnp.abs(pred_ref[...].astype(jnp.float32) - lab_ref[...].astype(jnp.float32))
    out_ref[...] = _block_partial(diff)


def _mae_masked_partial_kernel(pred_ref, lab_ref, mask_ref, sum_ref, cnt_ref):
    m = mask_ref[...].astype(jnp.float32)
    diff = jnp.abs(pred_ref[...].astype(jnp.float32) - lab_ref[...].astype(jnp.float32)) * m
    sum_ref[...] = _block_partial(diff)
    cnt_ref[...] = _block_partial(m)


def _run_partial_reduction(kernel, inputs, block_rows: int, n_outputs: int = 1):
    rows = inputs[0].shape[0]
    nblocks = rows // block_rows
    in_specs = [pl.BlockSpec((block_rows, LANE), lambda i: (i, 0)) for _ in inputs]
    out_shape = [jax.ShapeDtypeStruct((nblocks, 8, LANE), jnp.float32)
                 for _ in range(n_outputs)]
    out_specs = [pl.BlockSpec((1, 8, LANE), lambda i: (i, 0, 0))
                 for _ in range(n_outputs)]
    if n_outputs == 1:
        out_shape, out_specs = out_shape[0], out_specs[0]
    return pl.pallas_call(
        kernel,
        grid=(nblocks,),
        in_specs=in_specs,
        out_specs=out_specs,
        out_shape=out_shape,
        compiler_params=pltpu.CompilerParams(dimension_semantics=("parallel",)),
    )(*inputs)


# ---------------------------------------------------------------------------
# Module equivalent
# ---------------------------------------------------------------------------
class LossFunctionPallas:
    """JAX/Pallas port of utils.loss_function.LossFunction (forward only)."""

    def __init__(self, loss_type: str = "gaussian", demarcation_point=None):
        self.loss_type = loss_type
        self.demarcation_point = demarcation_point

    def __call__(self, predictions, labels, variance=None, mask=None):
        n = predictions.size  # static element count

        if self.loss_type == "gaussian":
            assert variance is not None, "gaussian loss needs variance"
            block_rows, padded_rows = _layout(n)
            pred2d = _flatten_pad(predictions, padded_rows)
            lab2d = _flatten_pad(labels, padded_rows)
            var2d = _flatten_pad(variance, padded_rows, pad_value=1.0)  # pad loss == 0
            partials = _run_partial_reduction(
                _gaussian_partial_kernel, [pred2d, lab2d, var2d], block_rows
            )
            return jnp.sum(partials) / jnp.float32(n)

        elif self.loss_type == "smooth gaussian":
            assert variance is not None, "smooth gaussian loss needs variance"
            assert self.demarcation_point is not None, "need demarcation_point"
            block_rows, padded_rows = _layout(n)
            pred2d = _flatten_pad(predictions, padded_rows)
            lab2d = _flatten_pad(labels, padded_rows)
            var2d = _flatten_pad(variance, padded_rows, pad_value=1.0)  # pad loss == 0
            kernel = functools.partial(
                _smooth_gaussian_partial_kernel, dem=float(self.demarcation_point)
            )
            partials = _run_partial_reduction(
                kernel, [pred2d, lab2d, var2d], block_rows
            )
            return jnp.sum(partials) / jnp.float32(n)

        elif self.loss_type == "mae":
            block_rows, padded_rows = _layout(n)
            pred2d = _flatten_pad(predictions, padded_rows)
            lab2d = _flatten_pad(labels, padded_rows)
            if mask is None:
                # Padded |pred - lab| is exactly 0, so the sum is exact and the
                # divisor is just n (static) -> no mask stream, no count output.
                partials = _run_partial_reduction(
                    _mae_partial_kernel, [pred2d, lab2d], block_rows
                )
                return jnp.sum(partials) / jnp.float32(n)
            else:
                mask2d = _flatten_pad(mask, padded_rows)  # zero-padded -> count exact
                s_part, c_part = _run_partial_reduction(
                    _mae_masked_partial_kernel,
                    [pred2d, lab2d, mask2d],
                    block_rows,
                    n_outputs=2,
                )
                # NOTE: all-zero mask gives 0/0 -> NaN, matching the torch reference.
                return jnp.sum(s_part) / jnp.sum(c_part)

        else:
            raise NotImplementedError


# ---------------------------------------------------------------------------
# Demo / self-check
# ---------------------------------------------------------------------------
if __name__ == "__main__":
    key = jax.random.PRNGKey(0)
    k1, k2, k3, k4 = jax.random.split(key, 4)
    shape = (2, 4, 16, 16)  # NCHW-style small shapes

    preds = jax.random.normal(k1, shape, dtype=jnp.float32)
    labels = jax.random.normal(k2, shape, dtype=jnp.float32)
    variance = jax.random.uniform(k3, shape, dtype=jnp.float32, minval=0.05, maxval=2.0)
    mask = (jax.random.uniform(k4, shape) > 0.5).astype(jnp.float32)

    # --- gaussian ---
    g = LossFunctionPallas("gaussian")(preds, labels, variance=variance)
    var_c = jnp.maximum(variance, 1e-10)
    g_ref = jnp.mean(0.5 * jnp.log(var_c) + (labels - preds) ** 2 / (2.0 * var_c))

    # --- smooth gaussian ---
    dem = 1.0
    sg = LossFunctionPallas("smooth gaussian", demarcation_point=dem)(
        preds, labels, variance=variance
    )
    diff = jnp.abs(labels - preds)
    l1 = 0.5 * jnp.log(var_c) + diff ** 2 / (2.0 * var_c)
    l2 = 0.5 * jnp.log(jnp.sqrt(var_c)) + diff / (2.0 * jnp.sqrt(var_c))
    sg_ref = jnp.mean(jnp.where(diff < dem, l1, l2))

    # --- mae (no mask) ---
    m0 = LossFunctionPallas("mae")(preds, labels)
    m0_ref = jnp.mean(jnp.abs(preds - labels))

    # --- mae (with mask) ---
    m1 = LossFunctionPallas("mae")(preds, labels, mask=mask)
    m1_ref = jnp.sum(jnp.abs(preds - labels) * mask) / jnp.sum(mask)

    results = jax.block_until_ready((g, sg, m0, m1))

    assert jnp.allclose(results[0], g_ref, rtol=1e-5, atol=1e-5)
    assert jnp.allclose(results[1], sg_ref, rtol=1e-5, atol=1e-5)
    assert jnp.allclose(results[2], m0_ref, rtol=1e-5, atol=1e-5)
    assert jnp.allclose(results[3], m1_ref, rtol=1e-5, atol=1e-5)

    print("KERNEL_OK")
</pallas_src>

<mosaic_0001>
module attributes {stable_mosaic.version = 11 : i64} {
  func.func @_gaussian_partial_kernel(%arg0: i32, %arg1: memref<16x128xf32, #tpu.memory_space<vmem>>, %arg2: memref<16x128xf32, #tpu.memory_space<vmem>>, %arg3: memref<16x128xf32, #tpu.memory_space<vmem>>, %arg4: memref<1x8x128xf32, #tpu.memory_space<vmem>>) attributes {dimension_semantics = [#tpu.dimension_semantics<parallel>], iteration_bounds = array<i64: 1>, scalar_prefetch = 0 : i64, scratch_operands = 0 : i64, tpu.core_type = #tpu.core_type<tc>, window_params = [{transform_indices = @transform_0, window_bounds = array<i64: 16, 128>}, {transform_indices = @transform_1, window_bounds = array<i64: 16, 128>}, {transform_indices = @transform_2, window_bounds = array<i64: 16, 128>}, {transform_indices = @transform_3, window_bounds = array<i64: 1, 8, 128>}]} {
    %c0 = arith.constant 0 : index
    %c0_0 = arith.constant 0 : index
    %0 = vector.load %arg1[%c0, %c0_0] : memref<16x128xf32, #tpu.memory_space<vmem>>, vector<16x128xf32>
    %c0_1 = arith.constant 0 : index
    %c0_2 = arith.constant 0 : index
    %1 = vector.load %arg2[%c0_1, %c0_2] : memref<16x128xf32, #tpu.memory_space<vmem>>, vector<16x128xf32>
    %c0_3 = arith.constant 0 : index
    %c0_4 = arith.constant 0 : index
    %2 = vector.load %arg3[%c0_3, %c0_4] : memref<16x128xf32, #tpu.memory_space<vmem>>, vector<16x128xf32>
    %cst = arith.constant 1.000000e-10 : f32
    %3 = vector.broadcast %cst : f32 to vector<16x128xf32>
    %4 = arith.maximumf %2, %3 : vector<16x128xf32>
    %5 = arith.subf %1, %0 : vector<16x128xf32>
    %6 = math.log %4 : vector<16x128xf32>
    %cst_5 = arith.constant 5.000000e-01 : f32
    %7 = vector.broadcast %cst_5 : f32 to vector<16x128xf32>
    %8 = arith.mulf %7, %6 : vector<16x128xf32>
    %9 = arith.mulf %5, %5 : vector<16x128xf32>
    %cst_6 = arith.constant 2.000000e+00 : f32
    %10 = vector.broadcast %cst_6 : f32 to vector<16x128xf32>
    %11 = arith.mulf %10, %4 : vector<16x128xf32>
    %12 = arith.divf %9, %11 : vector<16x128xf32>
    %13 = arith.addf %8, %12 : vector<16x128xf32>
    %14 = vector.shape_cast %13 : vector<16x128xf32> to vector<2x8x128xf32>
    %cst_7 = arith.constant dense<0.000000e+00> : vector<8x128xf32>
    %15 = vector.multi_reduction <add>, %14, %cst_7 [0] : vector<2x8x128xf32> to vector<8x128xf32>
    %16 = vector.shape_cast %15 : vector<8x128xf32> to vector<1x8x128xf32>
    %c0_8 = arith.constant 0 : index
    %c0_9 = arith.constant 0 : index
    %c0_10 = arith.constant 0 : index
    %17 = vector.load %arg4[%c0_8, %c0_9, %c0_10] : memref<1x8x128xf32, #tpu.memory_space<vmem>>, vector<1x8x128xf32>
    tpu.vector_store %arg4[%c0_8, %c0_9, %c0_10], %16 {strides = array<i32>} : memref<1x8x128xf32, #tpu.memory_space<vmem>>, vector<1x8x128xf32>,
    return
  }
  func.func @transform_0(%arg0: i32) -> (i32, i32) {
    %c0_i32 = arith.constant 0 : i32
    %c0_i32_0 = arith.constant 0 : i32
    return %arg0, %c0_i32 : i32, i32
  }
  func.func @transform_1(%arg0: i32) -> (i32, i32) {
    %c0_i32 = arith.constant 0 : i32
    %c0_i32_0 = arith.constant 0 : i32
    return %arg0, %c0_i32 : i32, i32
  }
  func.func @transform_2(%arg0: i32) -> (i32, i32) {
    %c0_i32 = arith.constant 0 : i32
    %c0_i32_0 = arith.constant 0 : i32
    return %arg0, %c0_i32 : i32, i32
  }
  func.func @transform_3(%arg0: i32) -> (i32, i32, i32) {
    %c0_i32 = arith.constant 0 : i32
    %c0_i32_0 = arith.constant 0 : i32
    %c0_i32_1 = arith.constant 0 : i32
    return %arg0, %c0_i32, %c0_i32_0 : i32, i32, i32
  }
}

</mosaic_0001>

<llo_original>
// kernel: tpu_custom_call.1
$region0: #{tpu_custom_call.1}
  #allocation0 [shape = 'u32[]', space=smem, size = 0x4, offset = 0x4, fixed_abs, tag = 'smem constant byte address 0x4 - core index']
  #allocation1 [shape = 'u32[144,128]{1,0:T(1,128)}', space=vmem, size = 0x12000, scoped, tag = 'internal scratch']
  %s0 = inlined_call_operand.hbm [shape: f32[16,128], index: 0, kind: input, shape index: {}]
  %s1 = inlined_call_operand.hbm [shape: f32[16,128], index: 1, kind: input, shape index: {}]
  %s2 = inlined_call_operand.hbm [shape: f32[16,128], index: 2, kind: input, shape index: {}]
  %s3 = inlined_call_operand.hbm [shape: f32[1,8,128], index: 3, kind: output, shape index: {}]
  %s4 = sld [smem:[#allocation0]]
  $region34: #{tpu_custom_call.1} parent=0
    _
  %s6 = ssub.s32 1, %s4
  %s7 = scalar_select 0, %s6, %s4
  $region1: #{tpu_custom_call.1} parent=0
    #allocation2 [shape = 'u8[8192]{0}', space=vmem, size = 0x2000, scoped, tag = 'input window, operand 0, single buffered']
    #allocation3 [shape = 's32[1]{0}', space=sflag, size = 0x4, scoped, tag = 'scoped memory for tpu_custom_call.1']
    #allocation4 [shape = 's32[1]{0}', space=sflag, size = 0x4, scoped, tag = 'scoped memory for tpu_custom_call.1']
    #allocation5 [shape = 'u8[8192]{0}', space=vmem, size = 0x2000, scoped, tag = 'input window, operand 1, single buffered']
    #allocation6 [shape = 's32[1]{0}', space=sflag, size = 0x4, scoped, tag = 'scoped memory for tpu_custom_call.1']
    #allocation7 [shape = 'u8[8192]{0}', space=vmem, size = 0x2000, scoped, tag = 'input window, operand 2, single buffered']
    #allocation8 [shape = 'u8[4096]{0}', space=vmem, size = 0x1000, scoped, tag = 'output window, operand 0, single buffered']
    %8 = vsyncpa [#allocation3], 0
    %9 = vsyncpa [#allocation6], 0
    %10 = vsyncpa [#allocation4], 0
    // Predicated region
    $region2: #{tpu_custom_call.1} parent=1 // pred_check
      _
    $region3: #{tpu_custom_call.1} parent=1 // pred_check_branch
      %12 = sbr.rel (0) target = $region5
    $region4: #{tpu_custom_call.1} parent=1 // pred_region
      %s14 = ssub.s32 256, 256
      %15 = vsyncadd [#allocation3], %s14
      %s16 = sshll.u32 [#allocation2], 4
      %s17 = int_to_ptr.vmem [resolvable:$true] %s16
      %22 = dma.hbm_to_vmem [thread:$0]  %s0, 256, %s17, [#allocation3], 128, 128, 8
    $region5: #{tpu_custom_call.1} parent=1 // pred_fallthru
      _
    // Predicated region
    $region6: #{tpu_custom_call.1} parent=1 // pred_check
      _
    $region7: #{tpu_custom_call.1} parent=1 // pred_check_branch
      %24 = sbr.rel (0) target = $region9
    $region8: #{tpu_custom_call.1} parent=1 // pred_region
      %s26 = ssub.s32 256, 256
      %27 = vsyncadd [#allocation6], %s26
      %s28 = sshll.u32 [#allocation5], 4
      %s29 = int_to_ptr.vmem [resolvable:$true] %s28
      %34 = dma.hbm_to_vmem [thread:$0]  %s1, 256, %s29, [#allocation6], 128, 128, 8
    $region9: #{tpu_custom_call.1} parent=1 // pred_fallthru
      _
    // Predicated region
    $region10: #{tpu_custom_call.1} parent=1 // pred_check
      _
    $region11: #{tpu_custom_call.1} parent=1 // pred_check_branch
      %36 = sbr.rel (0) target = $region13
    $region12: #{tpu_custom_call.1} parent=1 // pred_region
      %s38 = ssub.s32 256, 256
      %39 = vsyncadd [#allocation6], %s38
      %s40 = sshll.u32 [#allocation7], 4
      %s41 = int_to_ptr.vmem [resolvable:$true] %s40
      %46 = dma.hbm_to_vmem [thread:$0]  %s2, 256, %s41, [#allocation6], 128, 128, 8
    $region13: #{tpu_custom_call.1} parent=1 // pred_fallthru
      _
    // Predicated region
    $region14: #{tpu_custom_call.1} parent=1 // pred_check
      _
    $region15: #{tpu_custom_call.1} parent=1 // pred_check_branch
      %48 = sbr.rel (0) target = $region17
    $region16: #{tpu_custom_call.1} parent=1 // pred_region
      %49 = dma.done [#allocation3], 256
    $region17: #{tpu_custom_call.1} parent=1 // pred_fallthru
      _
    // Predicated region
    $region18: #{tpu_custom_call.1} parent=1 // pred_check
      _
    $region19: #{tpu_custom_call.1} parent=1 // pred_check_branch
      %51 = sbr.rel (0) target = $region21
    $region20: #{tpu_custom_call.1} parent=1 // pred_region
      %52 = dma.done [#allocation6], 256
    $region21: #{tpu_custom_call.1} parent=1 // pred_fallthru
      _
    // Predicated region
    $region22: #{tpu_custom_call.1} parent=1 // pred_check
      _
    $region23: #{tpu_custom_call.1} parent=1 // pred_check_branch
      %54 = sbr.rel (0) target = $region25
    $region24: #{tpu_custom_call.1} parent=1 // pred_region
      %55 = dma.done [#allocation6], 256
    $region25: #{tpu_custom_call.1} parent=1 // pred_fallthru
      _
    %v56 = vld [vmem:[#allocation2] sm:$0xff]
    %v57 = vld [vmem:[#allocation2 + $0x8] sm:$0xff]
    %v58 = vld [vmem:[#allocation5] sm:$0xff]
    %v59 = vld [vmem:[#allocation5 + $0x8] sm:$0xff]
    %v60 = vld [vmem:[#allocation7] sm:$0xff]
    %v61 = vld [vmem:[#allocation7 + $0x8] sm:$0xff]
    %v62 = vmax.f32 %v60, 1e-10
    %v63 = vmax.f32 %v61, 1e-10
    %v64 = vsub.f32 %v58, %v56
    %v65 = vsub.f32 %v59, %v57
    %v66 = vlog2.pop %v62
    %v67 = vmul.f32 %v66, 0.6931472
    %v68 = vlog2.pop %v63
    %v69 = vmul.f32 %v68, 0.6931472
    %v70 = vmul.f32 %v67, 0.5
    %v71 = vmul.f32 %v69, 0.5
    %v72 = vmul.f32 %v64, %v64
    %v73 = vmul.f32 %v65, %v65
    %v74 = vmul.f32 %v62, 2.0
    %v75 = vmul.f32 %v63, 2.0
    %v76 = vrcp.pop %v74
    %v77 = vmul.f32 %v72, %v76
    %v78 = vrcp.pop %v75
    %v79 = vmul.f32 %v73, %v78
    %v80 = vadd.f32 %v70, %v77
    %v81 = vadd.f32 %v71, %v79
    %v82 = vadd.f32 %v80, %v81
    %83 = vst [vmem:[#allocation8] sm:$0xff] %v82
    // Predicated region
    $region26: #{tpu_custom_call.1} parent=1 // pred_check
      _
    $region27: #{tpu_custom_call.1} parent=1 // pred_check_branch
      %85 = sbr.rel (0) target = $region29
    $region28: #{tpu_custom_call.1} parent=1 // pred_region
      %s87 = ssub.s32 128, 128
      %88 = vsyncadd [#allocation4], %s87
      %s90 = sshll.u32 [#allocation8], 4
      %s91 = int_to_ptr.vmem [resolvable:$true] %s90
      %93 = dma.vmem_to_hbm [thread:$0]  %s91, 128, %s3, [#allocation4]
    $region29: #{tpu_custom_call.1} parent=1 // pred_fallthru
      _
    // Predicated region
    $region30: #{tpu_custom_call.1} parent=1 // pred_check
      _
    $region31: #{tpu_custom_call.1} parent=1 // pred_check_branch
      %95 = sbr.rel (0) target = $region33
    $region32: #{tpu_custom_call.1} parent=1 // pred_region
      %96 = dma.done [#allocation4], 128
    $region33: #{tpu_custom_call.1} parent=1 // pred_fallthru
      _
    %97 = vsyncpa [#allocation3], 1
    %98 = vsyncpa [#allocation6], 1
    %99 = vsyncpa [#allocation4], 1

</llo_original>
